<compile_context>
chip_gen: v7x
topology: tpu7x:2x2x1
jax: 0.10.0
libtpu: 0.0.40
codegen_flags: <defaults>
</compile_context>

<pallas_src>
import functools

import jax
import jax.numpy as jnp
from jax.experimental import pallas as pl
from jax.experimental.pallas import tpu as pltpu


def _round_up(x, m):
    return ((x + m - 1) // m) * m


def _weight_row_offsets(V, H, body2, obj2):
    """Static row offsets of each weight block inside the packed bf16 slab.

    Every block starts at a multiple of 16 rows (bf16 sublane tile) so the
    in-kernel slices are tile-aligned views.
    """
    r_ih = 0
    r_hh = r_ih + _round_up(V, 16)
    r_cb = r_hh + _round_up(H, 16)
    r_co = r_cb + _round_up(H, 16)
    r_w1b = r_co + _round_up(H, 16)
    r_w1o = r_w1b + _round_up(body2, 16)
    r_w2 = r_w1o + _round_up(obj2, 16)
    return r_ih, r_hh, r_cb, r_co, r_w1b, r_w1o, r_w2


def _reward_kernel(desc_ref, body_ref, obj_ref, w_ref, b_ref, out_ref, *,
                   T, BP, V, H, body2, obj2, ff, n_obj):
    f32 = jnp.float32
    bf16 = jnp.bfloat16
    G = 4 * H
    r_ih, r_hh, r_cb, r_co, r_w1b, r_w1o, r_w2 = _weight_row_offsets(
        V, H, body2, obj2)

    # ---- LSTM: input projection hoisted out of the recurrence -------------
    # One (T*BP, V) x (V, 4H) matmul replaces T tiny per-step matmuls.
    x_proj = (jnp.dot(desc_ref[...], w_ref[r_ih:r_ih + V, 0:G],
                      preferred_element_type=f32)
              + b_ref[0:1, 0:G])                         # (T*BP, 4H) f32

    w_hh = w_ref[r_hh:r_hh + H, 0:G]                     # (H, 4H) bf16

    def gate_step(gates, c_prev):
        # One EUP sigmoid over the full (BP, 4H) slab; slice i/f/o from it.
        sig = jax.nn.sigmoid(gates)
        i_g = sig[:, 0 * H:1 * H]
        o_g = sig[:, 3 * H:4 * H]
        g_g = jnp.tanh(gates[:, 2 * H:3 * H])
        if c_prev is None:                               # t == 0: c_prev == 0
            c_new = i_g * g_g
        else:
            c_new = sig[:, 1 * H:2 * H] * c_prev + i_g * g_g
        h_new = o_g * jnp.tanh(c_new)
        return h_new, c_new

    # t = 0: h0 = c0 = 0, so the recurrent matmul and forget term vanish.
    h, c = gate_step(x_proj[0:BP, :], None)
    # t = 1..T-1, fully unrolled (T static); each x_proj slice is an aligned
    # 8-row tile view thanks to the BP padding.
    for t in range(1, T):
        gates = x_proj[t * BP:(t + 1) * BP, :] + jnp.dot(
            h.astype(bf16), w_hh, preferred_element_type=f32)
        h, c = gate_step(gates, c)

    h_b = h.astype(bf16)                                 # (BP, H)

    # ---- fc_cast + sigmoid, split into body / object column groups --------
    h_body = jax.nn.sigmoid(
        jnp.dot(h_b, w_ref[r_cb:r_cb + H, 0:body2], preferred_element_type=f32)
        + b_ref[1:2, 0:body2])                           # (BP, 2*body)
    h_obj = jax.nn.sigmoid(
        jnp.dot(h_b, w_ref[r_co:r_co + H, 0:obj2], preferred_element_type=f32)
        + b_ref[2:3, 0:obj2])                            # (BP, 2*obj)

    # ---- fc_reward layer 1, body branch: loop-invariant, computed once ----
    body_att = body_ref[...] * h_body                    # (BP, 2*body)
    body_pre = (jnp.dot(body_att.astype(bf16),
                        w_ref[r_w1b:r_w1b + body2, 0:ff],
                        preferred_element_type=f32)
                + b_ref[3:4, 0:ff])                      # (BP, ff)

    # ---- fc_reward layer 1, object branch: all objects in ONE MXU call ----
    obj_att = (obj_ref[...].reshape(n_obj, BP, obj2)
               * h_obj[None, :, :]).reshape(n_obj * BP, obj2)
    obj_pre = jnp.dot(obj_att.astype(bf16),
                      w_ref[r_w1o:r_w1o + obj2, 0:ff],
                      preferred_element_type=f32)        # (n_obj*BP, ff)

    # Fold the loop-invariant body_pre in as a broadcast over the 3-D view.
    hid = jnp.maximum(
        obj_pre.reshape(n_obj, BP, ff) + body_pre[None, :, :],
        0.0).reshape(n_obj * BP, ff)

    # ---- fc_reward layer 2 + sigmoid, all objects batched ------------------
    out_ref[...] = jax.nn.sigmoid(
        jnp.dot(hid.astype(bf16), w_ref[r_w2:r_w2 + ff, 0:1],
                preferred_element_type=f32)
        + b_ref[4:5, 0:1])                               # (n_obj*BP, 1)


def init_params(key, *, voc_size, num_hidden_lstm, sub_state_size, ff_size):
    """Deterministic synthetic init mirroring the module's __init__ shapes."""
    ks = jax.random.split(key, 8)
    H = num_hidden_lstm
    k_lstm = 1.0 / jnp.sqrt(H)

    def kaiming_uniform(k, fan_in, shape):
        bound = jnp.sqrt(6.0 / fan_in)
        return jax.random.uniform(k, shape, jnp.float32, -bound, bound)

    params = {
        # LSTM (PyTorch layout (4H, in)/(4H, H)); pre-transposed for x @ W
        "w_ih_t": jax.random.uniform(ks[0], (voc_size, 4 * H), jnp.float32,
                                     -k_lstm, k_lstm),
        "w_hh_t": jax.random.uniform(ks[1], (H, 4 * H), jnp.float32,
                                     -k_lstm, k_lstm),
        "b_lstm": (jax.random.uniform(ks[2], (1, 4 * H), jnp.float32, -k_lstm, k_lstm)
                   + jax.random.uniform(ks[3], (1, 4 * H), jnp.float32, -k_lstm, k_lstm)),
        # fc_cast: Linear(H -> sub_state_size), kaiming_uniform weight, zero bias
        "w_cast_t": kaiming_uniform(ks[4], H, (H, sub_state_size)),
        "b_cast": jnp.zeros((1, sub_state_size), jnp.float32),
        # fc_reward: Linear(sub_state -> ff) + ReLU, Linear(ff -> 1)
        "w1_t": kaiming_uniform(ks[5], sub_state_size, (sub_state_size, ff_size)),
        "b1": jnp.zeros((1, ff_size), jnp.float32),
        "w2_t": kaiming_uniform(ks[6], ff_size, (ff_size, 1)),
        "b2": jnp.zeros((1, 1), jnp.float32),
    }
    return params


def pack_params(params, *, voc_size, num_hidden_lstm, body_size, obj_size,
                ff_size):
    """Pack all weights into one bf16 slab + all biases into one f32 slab.

    Done ONCE at parameter-construction time (pre-casts weights to bf16), so
    the per-forward pallas_call has only 5 inputs / 5 DMAs total.
    """
    H = num_hidden_lstm
    V = voc_size
    body2, obj2 = 2 * body_size, 2 * obj_size
    r_ih, r_hh, r_cb, r_co, r_w1b, r_w1o, r_w2 = _weight_row_offsets(
        V, H, body2, obj2)
    n_rows = _round_up(r_w2 + ff_size, 16)
    width = _round_up(max(4 * H, ff_size, body2, obj2, 1), 128)

    w = jnp.zeros((n_rows, width), jnp.float32)
    w = w.at[r_ih:r_ih + V, 0:4 * H].set(params["w_ih_t"])
    w = w.at[r_hh:r_hh + H, 0:4 * H].set(params["w_hh_t"])
    w = w.at[r_cb:r_cb + H, 0:body2].set(params["w_cast_t"][:, :body2])
    w = w.at[r_co:r_co + H, 0:obj2].set(params["w_cast_t"][:, body2:])
    w = w.at[r_w1b:r_w1b + body2, 0:ff_size].set(params["w1_t"][:body2, :])
    w = w.at[r_w1o:r_w1o + obj2, 0:ff_size].set(params["w1_t"][body2:, :])
    w = w.at[r_w2:r_w2 + ff_size, 0:1].set(params["w2_t"])

    b = jnp.zeros((8, width), jnp.float32)
    b = b.at[0, 0:4 * H].set(params["b_lstm"][0])
    b = b.at[1, 0:body2].set(params["b_cast"][0, :body2])
    b = b.at[2, 0:obj2].set(params["b_cast"][0, body2:])
    b = b.at[3, 0:ff_size].set(params["b1"][0])
    b = b.at[4, 0:1].set(params["b2"][0])

    return {"w_slab": w.astype(jnp.bfloat16), "b_slab": b}


def reward_function_forward(s, description, packed, *,
                            body_size, obj_size, n_obj, state_size,
                            num_hidden_lstm, ff_size):
    B, T, V = description.shape
    H = num_hidden_lstm
    half = state_size // 2
    body2, obj2 = 2 * body_size, 2 * obj_size
    BP = max(8, _round_up(B, 8))          # sublane-aligned per-step row block
    bf16 = jnp.bfloat16
    s = s.astype(jnp.float32)

    # Time-major description, batch padded to BP rows per timestep -> one
    # batched LSTM input projection with aligned per-step slices.
    desc_tm = jnp.transpose(description.astype(bf16), (1, 0, 2))    # (T, B, V)
    desc_tm = jnp.pad(desc_tm, ((0, 0), (0, BP - B), (0, 0))).reshape(T * BP, V)

    # Pre-gather the unaligned state slices outside the kernel (keeps
    # cross-lane rotates/selects off the kernel's hot path), padded to BP rows.
    state_body = jnp.concatenate(
        [s[:, :body_size], s[:, half:half + body_size]], axis=1)    # (B, 2*body)
    state_body = jnp.pad(state_body, ((0, BP - B), (0, 0)))         # (BP, 2*body)
    obj_feats = []
    for i in range(n_obj):
        lo = body_size + i * obj_size
        of = jnp.concatenate(
            [s[:, lo:lo + obj_size], s[:, lo + half:lo + half + obj_size]],
            axis=1)
        obj_feats.append(jnp.pad(of, ((0, BP - B), (0, 0))))
    obj_slab = jnp.concatenate(obj_feats, axis=0)      # (n_obj*BP, 2*obj)

    kernel = functools.partial(
        _reward_kernel, T=T, BP=BP, V=V, H=H,
        body2=body2, obj2=obj2, ff=ff_size, n_obj=n_obj)

    vmem = pl.BlockSpec(memory_space=pltpu.MemorySpace.VMEM)

    out_col = pl.pallas_call(
        kernel,
        out_shape=jax.ShapeDtypeStruct((n_obj * BP, 1), jnp.float32),
        in_specs=[vmem] * 5,
        out_specs=vmem,
    )(desc_tm, state_body, obj_slab, packed["w_slab"], packed["b_slab"])

    # Row i*BP + b holds (batch b, object i); layout plumbing stays in the
    # wrapper (fused by XLA) -> (B, n_obj).
    return jnp.transpose(out_col.reshape(n_obj, BP))[:B]


if __name__ == "__main__":
    # Small, consistent configuration
    body_size = 3
    obj_size = 2
    n_obj = 2
    state_size = 2 * (body_size + n_obj * obj_size)   # 14
    sub_state_size = 2 * (body_size + obj_size)       # 10
    voc_size = 8
    sequence_length = 6
    batch_size = 2
    num_hidden_lstm = 16
    ff_size = 100

    key = jax.random.PRNGKey(0)
    k_s, k_d, k_p = jax.random.split(key, 3)

    s = jax.random.normal(k_s, (batch_size, state_size), jnp.float32)
    description = jax.random.normal(
        k_d, (batch_size, sequence_length, voc_size), jnp.float32)

    params = init_params(k_p, voc_size=voc_size, num_hidden_lstm=num_hidden_lstm,
                         sub_state_size=sub_state_size, ff_size=ff_size)
    # Pack + bf16-cast weights ONCE (outside the per-forward path).
    packed = pack_params(params, voc_size=voc_size,
                         num_hidden_lstm=num_hidden_lstm,
                         body_size=body_size, obj_size=obj_size,
                         ff_size=ff_size)
    packed = jax.tree_util.tree_map(jax.block_until_ready, packed)

    # jit the whole forward so the wrapper-side gathers / padding and the 5
    # operand DMAs + kernel launch are compiled (and amortized) together.
    fwd = jax.jit(reward_function_forward,
                  static_argnames=("body_size", "obj_size", "n_obj",
                                   "state_size", "num_hidden_lstm", "ff_size"))

    out = fwd(s, description, packed,
              body_size=body_size, obj_size=obj_size, n_obj=n_obj,
              state_size=state_size, num_hidden_lstm=num_hidden_lstm,
              ff_size=ff_size)
    out = jax.block_until_ready(out)

    assert out.shape == (batch_size, n_obj)
    assert bool(jnp.all(jnp.isfinite(out)))
    print("KERNEL_OK")
</pallas_src>

<mosaic_0001>
module attributes {stable_mosaic.version = 11 : i64} {
  func.func @_reward_kernel(%arg0: memref<48x8xbf16, #tpu.memory_space<vmem>>, %arg1: memref<8x6xf32, #tpu.memory_space<vmem>>, %arg2: memref<16x4xf32, #tpu.memory_space<vmem>>, %arg3: memref<208x128xbf16, #tpu.memory_space<vmem>>, %arg4: memref<8x128xf32, #tpu.memory_space<vmem>>, %arg5: memref<16x1xf32, #tpu.memory_space<vmem>>) attributes {dimension_semantics = [], scalar_prefetch = 0 : i64, scratch_operands = 0 : i64, tpu.core_type = #tpu.core_type<tc>} {
    %c0 = arith.constant 0 : index
    %c0_0 = arith.constant 0 : index
    %0 = vector.load %arg0[%c0, %c0_0] : memref<48x8xbf16, #tpu.memory_space<vmem>>, vector<48x8xbf16>
    %c0_1 = arith.constant 0 : index
    %c0_2 = arith.constant 0 : index
    %1 = vector.load %arg3[%c0_1, %c0_2] : memref<208x128xbf16, #tpu.memory_space<vmem>>, vector<8x64xbf16>
    %cst = arith.constant dense<0.000000e+00> : vector<48x64xf32>
    %2 = tpu.matmul %0, %1, %cst {dimension_numbers = #tpu.dot_dimension_numbers<[1], [0], [0], [1], [0, 0, 1, 1], [], []>} : vector<48x8xbf16>, vector<8x64xbf16>, vector<48x64xf32> -> vector<48x64xf32>
    %c0_3 = arith.constant 0 : index
    %c0_4 = arith.constant 0 : index
    %3 = vector.load %arg4[%c0_3, %c0_4] : memref<8x128xf32, #tpu.memory_space<vmem>>, vector<1x64xf32>
    %4 = vector.broadcast %3 : vector<1x64xf32> to vector<48x64xf32>
    %5 = arith.addf %2, %4 : vector<48x64xf32>
    %c16 = arith.constant 16 : index
    %c0_5 = arith.constant 0 : index
    %6 = vector.load %arg3[%c16, %c0_5] : memref<208x128xbf16, #tpu.memory_space<vmem>>, vector<16x64xbf16>
    %7 = vector.extract_strided_slice %5 {offsets = [0, 0], sizes = [8, 64], strides = [1, 1]} : vector<48x64xf32> to vector<8x64xf32>
    %8 = arith.negf %7 : vector<8x64xf32>
    %9 = math.exp %8 : vector<8x64xf32>
    %cst_6 = arith.constant 1.000000e+00 : f32
    %10 = vector.broadcast %cst_6 : f32 to vector<8x64xf32>
    %11 = arith.addf %10, %9 : vector<8x64xf32>
    %12 = arith.divf %10, %11 : vector<8x64xf32>
    %13 = vector.extract_strided_slice %12 {offsets = [0, 0], sizes = [8, 16], strides = [1, 1]} : vector<8x64xf32> to vector<8x16xf32>
    %14 = vector.extract_strided_slice %12 {offsets = [0, 48], sizes = [8, 16], strides = [1, 1]} : vector<8x64xf32> to vector<8x16xf32>
    %15 = vector.extract_strided_slice %7 {offsets = [0, 32], sizes = [8, 16], strides = [1, 1]} : vector<8x64xf32> to vector<8x16xf32>
    %16 = math.tanh %15 : vector<8x16xf32>
    %17 = arith.mulf %13, %16 : vector<8x16xf32>
    %18 = math.tanh %17 : vector<8x16xf32>
    %19 = arith.mulf %14, %18 : vector<8x16xf32>
    %20 = vector.extract_strided_slice %5 {offsets = [8, 0], sizes = [8, 64], strides = [1, 1]} : vector<48x64xf32> to vector<8x64xf32>
    %21 = arith.truncf %19 : vector<8x16xf32> to vector<8x16xbf16>
    %cst_7 = arith.constant dense<0.000000e+00> : vector<8x64xf32>
    %22 = tpu.matmul %21, %6, %cst_7 {dimension_numbers = #tpu.dot_dimension_numbers<[1], [0], [0], [1], [0, 0, 1, 1], [], []>} : vector<8x16xbf16>, vector<16x64xbf16>, vector<8x64xf32> -> vector<8x64xf32>
    %23 = arith.addf %20, %22 : vector<8x64xf32>
    %24 = arith.negf %23 : vector<8x64xf32>
    %25 = math.exp %24 : vector<8x64xf32>
    %cst_8 = arith.constant 1.000000e+00 : f32
    %26 = vector.broadcast %cst_8 : f32 to vector<8x64xf32>
    %27 = arith.addf %26, %25 : vector<8x64xf32>
    %28 = arith.divf %26, %27 : vector<8x64xf32>
    %29 = vector.extract_strided_slice %28 {offsets = [0, 0], sizes = [8, 16], strides = [1, 1]} : vector<8x64xf32> to vector<8x16xf32>
    %30 = vector.extract_strided_slice %28 {offsets = [0, 48], sizes = [8, 16], strides = [1, 1]} : vector<8x64xf32> to vector<8x16xf32>
    %31 = vector.extract_strided_slice %23 {offsets = [0, 32], sizes = [8, 16], strides = [1, 1]} : vector<8x64xf32> to vector<8x16xf32>
    %32 = math.tanh %31 : vector<8x16xf32>
    %33 = vector.extract_strided_slice %28 {offsets = [0, 16], sizes = [8, 16], strides = [1, 1]} : vector<8x64xf32> to vector<8x16xf32>
    %34 = arith.mulf %33, %17 : vector<8x16xf32>
    %35 = arith.mulf %29, %32 : vector<8x16xf32>
    %36 = arith.addf %34, %35 : vector<8x16xf32>
    %37 = math.tanh %36 : vector<8x16xf32>
    %38 = arith.mulf %30, %37 : vector<8x16xf32>
    %39 = vector.extract_strided_slice %5 {offsets = [16, 0], sizes = [8, 64], strides = [1, 1]} : vector<48x64xf32> to vector<8x64xf32>
    %40 = arith.truncf %38 : vector<8x16xf32> to vector<8x16xbf16>
    %cst_9 = arith.constant dense<0.000000e+00> : vector<8x64xf32>
    %41 = tpu.matmul %40, %6, %cst_9 {dimension_numbers = #tpu.dot_dimension_numbers<[1], [0], [0], [1], [0, 0, 1, 1], [], []>} : vector<8x16xbf16>, vector<16x64xbf16>, vector<8x64xf32> -> vector<8x64xf32>
    %42 = arith.addf %39, %41 : vector<8x64xf32>
    %43 = arith.negf %42 : vector<8x64xf32>
    %44 = math.exp %43 : vector<8x64xf32>
    %cst_10 = arith.constant 1.000000e+00 : f32
    %45 = vector.broadcast %cst_10 : f32 to vector<8x64xf32>
    %46 = arith.addf %45, %44 : vector<8x64xf32>
    %47 = arith.divf %45, %46 : vector<8x64xf32>
    %48 = vector.extract_strided_slice %47 {offsets = [0, 0], sizes = [8, 16], strides = [1, 1]} : vector<8x64xf32> to vector<8x16xf32>
    %49 = vector.extract_strided_slice %47 {offsets = [0, 48], sizes = [8, 16], strides = [1, 1]} : vector<8x64xf32> to vector<8x16xf32>
    %50 = vector.extract_strided_slice %42 {offsets = [0, 32], sizes = [8, 16], strides = [1, 1]} : vector<8x64xf32> to vector<8x16xf32>
    %51 = math.tanh %50 : vector<8x16xf32>
    %52 = vector.extract_strided_slice %47 {offsets = [0, 16], sizes = [8, 16], strides = [1, 1]} : vector<8x64xf32> to vector<8x16xf32>
    %53 = arith.mulf %52, %36 : vector<8x16xf32>
    %54 = arith.mulf %48, %51 : vector<8x16xf32>
    %55 = arith.addf %53, %54 : vector<8x16xf32>
    %56 = math.tanh %55 : vector<8x16xf32>
    %57 = arith.mulf %49, %56 : vector<8x16xf32>
    %58 = vector.extract_strided_slice %5 {offsets = [24, 0], sizes = [8, 64], strides = [1, 1]} : vector<48x64xf32> to vector<8x64xf32>
    %59 = arith.truncf %57 : vector<8x16xf32> to vector<8x16xbf16>
    %cst_11 = arith.constant dense<0.000000e+00> : vector<8x64xf32>
    %60 = tpu.matmul %59, %6, %cst_11 {dimension_numbers = #tpu.dot_dimension_numbers<[1], [0], [0], [1], [0, 0, 1, 1], [], []>} : vector<8x16xbf16>, vector<16x64xbf16>, vector<8x64xf32> -> vector<8x64xf32>
    %61 = arith.addf %58, %60 : vector<8x64xf32>
    %62 = arith.negf %61 : vector<8x64xf32>
    %63 = math.exp %62 : vector<8x64xf32>
    %cst_12 = arith.constant 1.000000e+00 : f32
    %64 = vector.broadcast %cst_12 : f32 to vector<8x64xf32>
    %65 = arith.addf %64, %63 : vector<8x64xf32>
    %66 = arith.divf %64, %65 : vector<8x64xf32>
    %67 = vector.extract_strided_slice %66 {offsets = [0, 0], sizes = [8, 16], strides = [1, 1]} : vector<8x64xf32> to vector<8x16xf32>
    %68 = vector.extract_strided_slice %66 {offsets = [0, 48], sizes = [8, 16], strides = [1, 1]} : vector<8x64xf32> to vector<8x16xf32>
    %69 = vector.extract_strided_slice %61 {offsets = [0, 32], sizes = [8, 16], strides = [1, 1]} : vector<8x64xf32> to vector<8x16xf32>
    %70 = math.tanh %69 : vector<8x16xf32>
    %71 = vector.extract_strided_slice %66 {offsets = [0, 16], sizes = [8, 16], strides = [1, 1]} : vector<8x64xf32> to vector<8x16xf32>
    %72 = arith.mulf %71, %55 : vector<8x16xf32>
    %73 = arith.mulf %67, %70 : vector<8x16xf32>
    %74 = arith.addf %72, %73 : vector<8x16xf32>
    %75 = math.tanh %74 : vector<8x16xf32>
    %76 = arith.mulf %68, %75 : vector<8x16xf32>
    %77 = vector.extract_strided_slice %5 {offsets = [32, 0], sizes = [8, 64], strides = [1, 1]} : vector<48x64xf32> to vector<8x64xf32>
    %78 = arith.truncf %76 : vector<8x16xf32> to vector<8x16xbf16>
    %cst_13 = arith.constant dense<0.000000e+00> : vector<8x64xf32>
    %79 = tpu.matmul %78, %6, %cst_13 {dimension_numbers = #tpu.dot_dimension_numbers<[1], [0], [0], [1], [0, 0, 1, 1], [], []>} : vector<8x16xbf16>, vector<16x64xbf16>, vector<8x64xf32> -> vector<8x64xf32>
    %80 = arith.addf %77, %79 : vector<8x64xf32>
    %81 = arith.negf %80 : vector<8x64xf32>
    %82 = math.exp %81 : vector<8x64xf32>
    %cst_14 = arith.constant 1.000000e+00 : f32
    %83 = vector.broadcast %cst_14 : f32 to vector<8x64xf32>
    %84 = arith.addf %83, %82 : vector<8x64xf32>
    %85 = arith.divf %83, %84 : vector<8x64xf32>
    %86 = vector.extract_strided_slice %85 {offsets = [0, 0], sizes = [8, 16], strides = [1, 1]} : vector<8x64xf32> to vector<8x16xf32>
    %87 = vector.extract_strided_slice %85 {offsets = [0, 48], sizes = [8, 16], strides = [1, 1]} : vector<8x64xf32> to vector<8x16xf32>
    %88 = vector.extract_strided_slice %80 {offsets = [0, 32], sizes = [8, 16], strides = [1, 1]} : vector<8x64xf32> to vector<8x16xf32>
    %89 = math.tanh %88 : vector<8x16xf32>
    %90 = vector.extract_strided_slice %85 {offsets = [0, 16], sizes = [8, 16], strides = [1, 1]} : vector<8x64xf32> to vector<8x16xf32>
    %91 = arith.mulf %90, %74 : vector<8x16xf32>
    %92 = arith.mulf %86, %89 : vector<8x16xf32>
    %93 = arith.addf %91, %92 : vector<8x16xf32>
    %94 = math.tanh %93 : vector<8x16xf32>
    %95 = arith.mulf %87, %94 : vector<8x16xf32>
    %96 = vector.extract_strided_slice %5 {offsets = [40, 0], sizes = [8, 64], strides = [1, 1]} : vector<48x64xf32> to vector<8x64xf32>
    %97 = arith.truncf %95 : vector<8x16xf32> to vector<8x16xbf16>
    %cst_15 = arith.constant dense<0.000000e+00> : vector<8x64xf32>
    %98 = tpu.matmul %97, %6, %cst_15 {dimension_numbers = #tpu.dot_dimension_numbers<[1], [0], [0], [1], [0, 0, 1, 1], [], []>} : vector<8x16xbf16>, vector<16x64xbf16>, vector<8x64xf32> -> vector<8x64xf32>
    %99 = arith.addf %96, %98 : vector<8x64xf32>
    %100 = arith.negf %99 : vector<8x64xf32>
    %101 = math.exp %100 : vector<8x64xf32>
    %cst_16 = arith.constant 1.000000e+00 : f32
    %102 = vector.broadcast %cst_16 : f32 to vector<8x64xf32>
    %103 = arith.addf %102, %101 : vector<8x64xf32>
    %104 = arith.divf %102, %103 : vector<8x64xf32>
    %105 = vector.extract_strided_slice %104 {offsets = [0, 0], sizes = [8, 16], strides = [1, 1]} : vector<8x64xf32> to vector<8x16xf32>
    %106 = vector.extract_strided_slice %104 {offsets = [0, 48], sizes = [8, 16], strides = [1, 1]} : vector<8x64xf32> to vector<8x16xf32>
    %107 = vector.extract_strided_slice %99 {offsets = [0, 32], sizes = [8, 16], strides = [1, 1]} : vector<8x64xf32> to vector<8x16xf32>
    %108 = math.tanh %107 : vector<8x16xf32>
    %109 = vector.extract_strided_slice %104 {offsets = [0, 16], sizes = [8, 16], strides = [1, 1]} : vector<8x64xf32> to vector<8x16xf32>
    %110 = arith.mulf %109, %93 : vector<8x16xf32>
    %111 = arith.mulf %105, %108 : vector<8x16xf32>
    %112 = arith.addf %110, %111 : vector<8x16xf32>
    %113 = math.tanh %112 : vector<8x16xf32>
    %114 = arith.mulf %106, %113 : vector<8x16xf32>
    %115 = arith.truncf %114 : vector<8x16xf32> to vector<8x16xbf16>
    %c32 = arith.constant 32 : index
    %c0_17 = arith.constant 0 : index
    %116 = vector.load %arg3[%c32, %c0_17] : memref<208x128xbf16, #tpu.memory_space<vmem>>, vector<16x6xbf16>
    %cst_18 = arith.constant dense<0.000000e+00> : vector<8x6xf32>
    %117 = tpu.matmul %115, %116, %cst_18 {dimension_numbers = #tpu.dot_dimension_numbers<[1], [0], [0], [1], [0, 0, 1, 1], [], []>} : vector<8x16xbf16>, vector<16x6xbf16>, vector<8x6xf32> -> vector<8x6xf32>
    %c1 = arith.constant 1 : index
    %c0_19 = arith.constant 0 : index
    %118 = vector.load %arg4[%c1, %c0_19] : memref<8x128xf32, #tpu.memory_space<vmem>>, vector<1x6xf32>
    %119 = vector.broadcast %118 : vector<1x6xf32> to vector<8x6xf32>
    %120 = arith.addf %117, %119 : vector<8x6xf32>
    %121 = arith.negf %120 : vector<8x6xf32>
    %122 = math.exp %121 : vector<8x6xf32>
    %cst_20 = arith.constant 1.000000e+00 : f32
    %123 = vector.broadcast %cst_20 : f32 to vector<8x6xf32>
    %124 = arith.addf %123, %122 : vector<8x6xf32>
    %125 = arith.divf %123, %124 : vector<8x6xf32>
    %c48 = arith.constant 48 : index
    %c0_21 = arith.constant 0 : index
    %126 = vector.load %arg3[%c48, %c0_21] : memref<208x128xbf16, #tpu.memory_space<vmem>>, vector<16x4xbf16>
    %cst_22 = arith.constant dense<0.000000e+00> : vector<8x4xf32>
    %127 = tpu.matmul %115, %126, %cst_22 {dimension_numbers = #tpu.dot_dimension_numbers<[1], [0], [0], [1], [0, 0, 1, 1], [], []>} : vector<8x16xbf16>, vector<16x4xbf16>, vector<8x4xf32> -> vector<8x4xf32>
    %c2 = arith.constant 2 : index
    %c0_23 = arith.constant 0 : index
    %128 = vector.load %arg4[%c2, %c0_23] : memref<8x128xf32, #tpu.memory_space<vmem>>, vector<1x4xf32>
    %129 = vector.broadcast %128 : vector<1x4xf32> to vector<8x4xf32>
    %130 = arith.addf %127, %129 : vector<8x4xf32>
    %131 = arith.negf %130 : vector<8x4xf32>
    %132 = math.exp %131 : vector<8x4xf32>
    %cst_24 = arith.constant 1.000000e+00 : f32
    %133 = vector.broadcast %cst_24 : f32 to vector<8x4xf32>
    %134 = arith.addf %133, %132 : vector<8x4xf32>
    %135 = arith.divf %133, %134 : vector<8x4xf32>
    %c0_25 = arith.constant 0 : index
    %c0_26 = arith.constant 0 : index
    %136 = vector.load %arg1[%c0_25, %c0_26] : memref<8x6xf32, #tpu.memory_space<vmem>>, vector<8x6xf32>
    %137 = arith.mulf %136, %125 : vector<8x6xf32>
    %138 = arith.truncf %137 : vector<8x6xf32> to vector<8x6xbf16>
    %c64 = arith.constant 64 : index
    %c0_27 = arith.constant 0 : index
    %139 = vector.load %arg3[%c64, %c0_27] : memref<208x128xbf16, #tpu.memory_space<vmem>>, vector<6x100xbf16>
    %cst_28 = arith.constant dense<0.000000e+00> : vector<8x100xf32>
    %140 = tpu.matmul %138, %139, %cst_28 {dimension_numbers = #tpu.dot_dimension_numbers<[1], [0], [0], [1], [0, 0, 1, 1], [], []>} : vector<8x6xbf16>, vector<6x100xbf16>, vector<8x100xf32> -> vector<8x100xf32>
    %c3 = arith.constant 3 : index
    %c0_29 = arith.constant 0 : index
    %141 = vector.load %arg4[%c3, %c0_29] : memref<8x128xf32, #tpu.memory_space<vmem>>, vector<1x100xf32>
    %142 = vector.broadcast %141 : vector<1x100xf32> to vector<8x100xf32>
    %143 = arith.addf %140, %142 : vector<8x100xf32>
    %c0_30 = arith.constant 0 : index
    %c0_31 = arith.constant 0 : index
    %144 = vector.load %arg2[%c0_30, %c0_31] : memref<16x4xf32, #tpu.memory_space<vmem>>, vector<16x4xf32>
    %145 = vector.shape_cast %144 : vector<16x4xf32> to vector<2x8x4xf32>
    %146 = vector.shape_cast %135 : vector<8x4xf32> to vector<1x8x4xf32>
    %147 = vector.broadcast %146 : vector<1x8x4xf32> to vector<2x8x4xf32>
    %148 = arith.mulf %145, %147 : vector<2x8x4xf32>
    %149 = vector.shape_cast %148 : vector<2x8x4xf32> to vector<16x4xf32>
    %150 = arith.truncf %149 : vector<16x4xf32> to vector<16x4xbf16>
    %c80 = arith.constant 80 : index
    %c0_32 = arith.constant 0 : index
    %151 = vector.load %arg3[%c80, %c0_32] : memref<208x128xbf16, #tpu.memory_space<vmem>>, vector<4x100xbf16>
    %cst_33 = arith.constant dense<0.000000e+00> : vector<16x100xf32>
    %152 = tpu.matmul %150, %151, %cst_33 {dimension_numbers = #tpu.dot_dimension_numbers<[1], [0], [0], [1], [0, 0, 1, 1], [], []>} : vector<16x4xbf16>, vector<4x100xbf16>, vector<16x100xf32> -> vector<16x100xf32>
    %153 = vector.shape_cast %152 : vector<16x100xf32> to vector<2x8x100xf32>
    %154 = vector.shape_cast %143 : vector<8x100xf32> to vector<1x8x100xf32>
    %155 = vector.broadcast %154 : vector<1x8x100xf32> to vector<2x8x100xf32>
    %156 = arith.addf %153, %155 : vector<2x8x100xf32>
    %cst_34 = arith.constant 0.000000e+00 : f32
    %157 = vector.broadcast %cst_34 : f32 to vector<2x8x100xf32>
    %158 = arith.maximumf %156, %157 : vector<2x8x100xf32>
    %159 = vector.shape_cast %158 : vector<2x8x100xf32> to vector<16x100xf32>
    %160 = arith.truncf %159 : vector<16x100xf32> to vector<16x100xbf16>
    %c96 = arith.constant 96 : index
    %c0_35 = arith.constant 0 : index
    %161 = vector.load %arg3[%c96, %c0_35] : memref<208x128xbf16, #tpu.memory_space<vmem>>, vector<100x1xbf16>
    %cst_36 = arith.constant dense<0.000000e+00> : vector<16x1xf32>
    %162 = tpu.matmul %160, %161, %cst_36 {dimension_numbers = #tpu.dot_dimension_numbers<[1], [0], [0], [1], [0, 0, 1, 1], [], []>} : vector<16x100xbf16>, vector<100x1xbf16>, vector<16x1xf32> -> vector<16x1xf32>
    %c4 = arith.constant 4 : index
    %c0_37 = arith.constant 0 : index
    %163 = vector.load %arg4[%c4, %c0_37] : memref<8x128xf32, #tpu.memory_space<vmem>>, vector<1x1xf32>
    %164 = vector.broadcast %163 : vector<1x1xf32> to vector<16x1xf32>
    %165 = arith.addf %162, %164 : vector<16x1xf32>
    %166 = arith.negf %165 : vector<16x1xf32>
    %167 = math.exp %166 : vector<16x1xf32>
    %cst_38 = arith.constant 1.000000e+00 : f32
    %168 = vector.broadcast %cst_38 : f32 to vector<16x1xf32>
    %169 = arith.addf %168, %167 : vector<16x1xf32>
    %170 = arith.divf %168, %169 : vector<16x1xf32>
    %c0_39 = arith.constant 0 : index
    %c0_40 = arith.constant 0 : index
    %171 = vector.load %arg5[%c0_39, %c0_40] : memref<16x1xf32, #tpu.memory_space<vmem>>, vector<16x1xf32>
    tpu.vector_store %arg5[%c0_39, %c0_40], %170 {strides = array<i32>} : memref<16x1xf32, #tpu.memory_space<vmem>>, vector<16x1xf32>,
    return
  }
}

</mosaic_0001>

<llo_original>
// kernel: reward_function_forward.1
$region0: #{reward_function_forward.1}
  #allocation0 [shape = 'u32[]', space=smem, size = 0x4, offset = 0x4, fixed_abs, tag = 'smem constant byte address 0x4 - core index']
  #allocation1 [shape = 'u32[144,128]{1,0:T(1,128)}', space=vmem, size = 0x12000, scoped, tag = 'internal scratch']
  %s0 = inlined_call_operand.vmem [shape: bf16[48,8], index: 0, kind: input, shape index: {}]
  %s1 = inlined_call_operand.vmem [shape: f32[8,6], index: 1, kind: input, shape index: {}]
  %s2 = inlined_call_operand.vmem [shape: f32[16,4], index: 2, kind: input, shape index: {}]
  %s3 = inlined_call_operand.vmem [shape: bf16[208,128], index: 3, kind: input, shape index: {}]
  %s4 = inlined_call_operand.vmem [shape: f32[8,128], index: 4, kind: input, shape index: {}]
  %s5 = inlined_call_operand.vmem [shape: f32[16,1], index: 5, kind: output, shape index: {}]
  %s6 = sld [smem:[#allocation0]]
  $region30: #{reward_function_forward.1} parent=0
    _
  %s8 = ssub.s32 1, %s6
  %s9 = scalar_select 0, %s8, %s6
  // Predicated region
  $region2: #{reward_function_forward.1} parent=0 // pred_check
    _
  $region3: #{reward_function_forward.1} parent=0 // pred_check_branch
    %11 = sbr.rel (0) target = $region5
  $region4: #{reward_function_forward.1} parent=0 // pred_region
    _
  $region5: #{reward_function_forward.1} parent=0 // pred_fallthru
    _
  // Predicated region
  $region6: #{reward_function_forward.1} parent=0 // pred_check
    _
  $region7: #{reward_function_forward.1} parent=0 // pred_check_branch
    %13 = sbr.rel (0) target = $region9
  $region8: #{reward_function_forward.1} parent=0 // pred_region
    _
  $region9: #{reward_function_forward.1} parent=0 // pred_fallthru
    _
  // Predicated region
  $region10: #{reward_function_forward.1} parent=0 // pred_check
    _
  $region11: #{reward_function_forward.1} parent=0 // pred_check_branch
    %15 = sbr.rel (0) target = $region13
  $region12: #{reward_function_forward.1} parent=0 // pred_region
    _
  $region13: #{reward_function_forward.1} parent=0 // pred_fallthru
    _
  // Predicated region
  $region14: #{reward_function_forward.1} parent=0 // pred_check
    _
  $region15: #{reward_function_forward.1} parent=0 // pred_check_branch
    %17 = sbr.rel (0) target = $region17
  $region16: #{reward_function_forward.1} parent=0 // pred_region
    _
  $region17: #{reward_function_forward.1} parent=0 // pred_fallthru
    _
  // Predicated region
  $region18: #{reward_function_forward.1} parent=0 // pred_check
    _
  $region19: #{reward_function_forward.1} parent=0 // pred_check_branch
    %19 = sbr.rel (0) target = $region21
  $region20: #{reward_function_forward.1} parent=0 // pred_region
    _
  $region21: #{reward_function_forward.1} parent=0 // pred_fallthru
    _
  %v21 = vld [vmem:[%s0] sm:$0xf]
  %v22 = vld [vmem:[%s0 + $0x4] sm:$0xf]
  %v23 = vld [vmem:[%s0 + $0x8] sm:$0xf]
  %v24 = vld [vmem:[%s0 + $0xc] sm:$0xf]
  %v25 = vld [vmem:[%s0 + $0x10] sm:$0xf]
  %v26 = vld [vmem:[%s0 + $0x14] sm:$0xf]
  %v27 = vld [vmem:[%s3] sm:$0xf]
  %v28 = vld [vmem:[%s4] sm:$0x1]
  %v29 = vlaneseq
  %v30 = vshrl.u32 %v29, 7
  %v31 = vsub.s32 0, %v30
  %v32 = vrot.slane %v28, %v31
  %v39 = vunpack.c.l.b16 %v21
  %v40 = vunpack.c.l.b16 %v22
  %v41 = vunpack.c.l.b16 %v23
  %v42 = vunpack.c.l.b16 %v24
  %v43 = vunpack.c.l.b16 %v25
  %v44 = vunpack.c.l.b16 %v26
  %v45 = vpack.c.b16 %v40, %v39
  %v46 = vpack.c.b16 %v42, %v41
  %v47 = vpack.c.b16 %v44, %v43
  %vm48 = vcmask 64512
  %v50 = vsel %vm48, %v45, 0
  %v53 = vsel %vm48, %v46, 0
  %v56 = vsel %vm48, %v47, 0
  %vm58 = vcmask 1043456
  %v60 = vsel %vm58, %v27, 0
  %62 = vmatprep.subr.bf16.mxu0 0
  %63 = vmatpush1.bf16.msra.mxu0 %v60
  %64 = vmatprep.subr.bf16.mxu0 0
  %65 = vmatpush1.bf16.msra.mxu0 0
  %66 = vmatprep.subr.bf16.mxu0 0
  %67 = vmatpush1.bf16.msra.mxu0 0
  %68 = vmatprep.subr.bf16.mxu0 0
  %69 = vmatpush1.bf16.msra.mxu0 0
  %70 = vmatprep.subr.bf16.mxu0 0
  %71 = vmatpush1.bf16.msra.mxu0 0
  %72 = vmatprep.subr.bf16.mxu0 0
  %73 = vmatpush1.bf16.msra.mxu0 0
  %74 = vmatprep.subr.bf16.mxu0 0
  %75 = vmatpush1.bf16.msra.mxu0 0
  %76 = vmatprep.subr.bf16.mxu0 0
  %77 = vmatpush1.bf16.msra.mxu0 0
  %78 = vmatprep.subr.bf16.mxu0 0
  %79 = vmatpush1.bf16.msra.mxu0 0
  %80 = vmatprep.subr.bf16.mxu0 0
  %81 = vmatpush1.bf16.msra.mxu0 0
  %82 = vmatprep.subr.bf16.mxu0 0
  %83 = vmatpush1.bf16.msra.mxu0 0
  %84 = vmatprep.subr.bf16.mxu0 0
  %85 = vmatpush1.bf16.msra.mxu0 0
  %86 = vmatprep.subr.bf16.mxu0 0
  %87 = vmatpush1.bf16.msra.mxu0 0
  %88 = vmatprep.subr.bf16.mxu0 0
  %89 = vmatpush1.bf16.msra.mxu0 0
  %90 = vmatprep.subr.bf16.mxu0 0
  %91 = vmatpush1.bf16.msra.mxu0 0
  %92 = vmatprep.subr.bf16.mxu0 0
  %93 = vmatpush1.bf16.msra.mxu0 0
  %94 = vmatprep.mubr.bf16.mxu0 0
  %95 = vmatmul.mubr.bf16.gmra.mrb[0].mxu0 %v50
  %v96 = vpop.f32.mrb[0].mxu0
  %v97 = vadd.f32 %v32, %v96
  %v98 = vpop.f32.mrb[0].mxu0
  %v99 = vpop.f32.mrb[0].mxu0
  %v100 = vadd.f32 %v32, %v99
  %v101 = vpop.f32.mrb[0].mxu0
  %102 = vmatprep.mubr.bf16.mxu0 0
  %103 = vmatmul.mubr.bf16.gmra.mrb[0].mxu0 %v53
  %v104 = vpop.f32.mrb[0].mxu0
  %v105 = vadd.f32 %v32, %v104
  %v106 = vpop.f32.mrb[0].mxu0
  %v107 = vpop.f32.mrb[0].mxu0
  %v108 = vadd.f32 %v32, %v107
  %v109 = vpop.f32.mrb[0].mxu0
  %110 = vmatprep.mubr.bf16.mxu0 0
  %111 = vmatmul.mubr.bf16.gmra.mrb[0].mxu0 %v56
  %v112 = vpop.f32.mrb[0].mxu0
  %v113 = vadd.f32 %v32, %v112
  %v114 = vpop.f32.mrb[0].mxu0
  %v115 = vpop.f32.mrb[0].mxu0
  %v116 = vadd.f32 %v32, %v115
  %v117 = vpop.f32.mrb[0].mxu0
  %118 = vdwg.mxu0
  %v119 = vld [vmem:[%s3 + $0x8] sm:$0xf]
  %v120 = vld [vmem:[%s3 + $0xc] sm:$0xf]
  %v121 = vxor.u32 %v97, 2147483648
  %v122 = vmul.f32 %v121, 1.442695
  %v123 = vpow.pop %v122
  %v124 = vadd.f32 %v123, 1.0
  %v125 = vrcp.pop %v124
  %v126 = vmul.f32 1.0, %v125
  %v127 = vtanh.pop %v97
  %129 = vrot.lane.b32.xlu0 %v127, 96
  %v130 = vpop.permute.xlu0 %129
  %v132 = vmul.f32 %v126, %v130
  %v133 = vtanh.pop %v132
  %135 = vrot.lane.b32.xlu0 %v133, 48
  %v136 = vpop.permute.xlu0 %135
  %v138 = vmul.f32 %v126, %v136
  %v139 = vpack.c.bf16 %v138, %v138
  %141 = vrot.lane.b32.xlu0 %v139, 80
  %v142 = vpop.permute.xlu0 %141
  %v145 = vunpack.c.l.b16 %v119
  %v146 = vunpack.c.l.b16 %v120
  %v147 = vpack.c.b16 %v146, %v145
  %vm149 = vcmask 130048
  %v151 = vsel %vm149, %v142, 0
  %153 = vmatprep.subr.bf16.mxu0 0
  %154 = vmatpush1.bf16.msra.mxu0 %v147
  %155 = vmatprep.subr.bf16.mxu0 0
  %156 = vmatpush1.bf16.msra.mxu0 0
  %157 = vmatprep.subr.bf16.mxu0 0
  %158 = vmatpush1.bf16.msra.mxu0 0
  %159 = vmatprep.subr.bf16.mxu0 0
  %160 = vmatpush1.bf16.msra.mxu0 0
  %161 = vmatprep.subr.bf16.mxu0 0
  %162 = vmatpush1.bf16.msra.mxu0 0
  %163 = vmatprep.subr.bf16.mxu0 0
  %164 = vmatpush1.bf16.msra.mxu0 0
  %165 = vmatprep.subr.bf16.mxu0 0
  %166 = vmatpush1.bf16.msra.mxu0 0
  %167 = vmatprep.subr.bf16.mxu0 0
  %168 = vmatpush1.bf16.msra.mxu0 0
  %169 = vmatprep.subr.bf16.mxu0 0
  %170 = vmatpush1.bf16.msra.mxu0 0
  %171 = vmatprep.subr.bf16.mxu0 0
  %172 = vmatpush1.bf16.msra.mxu0 0
  %173 = vmatprep.subr.bf16.mxu0 0
  %174 = vmatpush1.bf16.msra.mxu0 0
  %175 = vmatprep.subr.bf16.mxu0 0
  %176 = vmatpush1.bf16.msra.mxu0 0
  %177 = vmatprep.subr.bf16.mxu0 0
  %178 = vmatpush1.bf16.msra.mxu0 0
  %179 = vmatprep.subr.bf16.mxu0 0
  %180 = vmatpush1.bf16.msra.mxu0 0
  %181 = vmatprep.subr.bf16.mxu0 0
  %182 = vmatpush1.bf16.msra.mxu0 0
  %183 = vmatprep.subr.bf16.mxu0 0
  %184 = vmatpush1.bf16.msra.mxu0 0
  %185 = vmatprep.mubr.bf16.mxu0 0
  %186 = vmatmul.mubr.bf16.gmra.mrb[0].mxu0 %v151
  %v187 = vpop.f32.mrb[0].mxu0
  %v188 = vadd.f32 0.0, %v187
  %v189 = vpop.f32.mrb[0].mxu0
  %v190 = vpop.f32.mrb[0].mxu0
  %v191 = vpop.f32.mrb[0].mxu0
  %192 = vdwg.mxu0
  %v193 = vadd.f32 %v100, %v188
  %v194 = vxor.u32 %v193, 2147483648
  %v195 = vmul.f32 %v194, 1.442695
  %v196 = vpow.pop %v195
  %v197 = vadd.f32 %v196, 1.0
  %v198 = vrcp.pop %v197
  %v199 = vmul.f32 1.0, %v198
  %v200 = vtanh.pop %v193
  %202 = vrot.lane.b32.xlu0 %v132, 16
  %v203 = vpop.permute.xlu0 %202
  %v205 = vmul.f32 %v199, %v203
  %207 = vrot.lane.b32.xlu0 %v200, 96
  %v208 = vpop.permute.xlu0 %207
  %v210 = vmul.f32 %v199, %v208
  %212 = vrot.lane.b32.xlu0 %v210, 16
  %v213 = vpop.permute.xlu0 %212
  %v215 = vadd.f32 %v205, %v213
  %v216 = vtanh.pop %v215
  %218 = vrot.lane.b32.xlu0 %v216, 32
  %v219 = vpop.permute.xlu0 %218
  %v221 = vmul.f32 %v199, %v219
  %v222 = vpack.c.bf16 %v221, %v221
  %224 = vrot.lane.b32.xlu0 %v222, 80
  %v225 = vpop.permute.xlu0 %224
  %v227 = vsel %vm149, %v225, 0
  %229 = vmatprep.subr.bf16.mxu0 0
  %230 = vmatpush1.bf16.msra.mxu0 %v147
  %231 = vmatprep.subr.bf16.mxu0 0
  %232 = vmatpush1.bf16.msra.mxu0 0
  %233 = vmatprep.subr.bf16.mxu0 0
  %234 = vmatpush1.bf16.msra.mxu0 0
  %235 = vmatprep.subr.bf16.mxu0 0
  %236 = vmatpush1.bf16.msra.mxu0 0
  %237 = vmatprep.subr.bf16.mxu0 0
  %238 = vmatpush1.bf16.msra.mxu0 0
  %239 = vmatprep.subr.bf16.mxu0 0
  %240 = vmatpush1.bf16.msra.mxu0 0
  %241 = vmatprep.subr.bf16.mxu0 0
  %242 = vmatpush1.bf16.msra.mxu0 0
  %243 = vmatprep.subr.bf16.mxu0 0
  %244 = vmatpush1.bf16.msra.mxu0 0
  %245 = vmatprep.subr.bf16.mxu0 0
  %246 = vmatpush1.bf16.msra.mxu0 0
  %247 = vmatprep.subr.bf16.mxu0 0
  %248 = vmatpush1.bf16.msra.mxu0 0
  %249 = vmatprep.subr.bf16.mxu0 0
  %250 = vmatpush1.bf16.msra.mxu0 0
  %251 = vmatprep.subr.bf16.mxu0 0
  %252 = vmatpush1.bf16.msra.mxu0 0
  %253 = vmatprep.subr.bf16.mxu0 0
  %254 = vmatpush1.bf16.msra.mxu0 0
  %255 = vmatprep.subr.bf16.mxu0 0
  %256 = vmatpush1.bf16.msra.mxu0 0
  %257 = vmatprep.subr.bf16.mxu0 0
  %258 = vmatpush1.bf16.msra.mxu0 0
  %259 = vmatprep.subr.bf16.mxu0 0
  %260 = vmatpush1.bf16.msra.mxu0 0
  %261 = vmatprep.mubr.bf16.mxu0 0
  %262 = vmatmul.mubr.bf16.gmra.mrb[0].mxu0 %v227
  %v263 = vpop.f32.mrb[0].mxu0
  %v264 = vadd.f32 0.0, %v263
  %v265 = vpop.f32.mrb[0].mxu0
  %v266 = vpop.f32.mrb[0].mxu0
  %v267 = vpop.f32.mrb[0].mxu0
  %268 = vdwg.mxu0
  %v269 = vadd.f32 %v105, %v264
  %v270 = vxor.u32 %v269, 2147483648
  %v271 = vmul.f32 %v270, 1.442695
  %v272 = vpow.pop %v271
  %v273 = vadd.f32 %v272, 1.0
  %v274 = vrcp.pop %v273
  %v275 = vmul.f32 1.0, %v274
  %v276 = vtanh.pop %v269
  %v277 = vmul.f32 %v275, %v215
  %279 = vrot.lane.b32.xlu0 %v276, 96
  %v280 = vpop.permute.xlu0 %279
  %v282 = vmul.f32 %v275, %v280
  %284 = vrot.lane.b32.xlu0 %v282, 16
  %v285 = vpop.permute.xlu0 %284
  %v287 = vadd.f32 %v277, %v285
  %v288 = vtanh.pop %v287
  %290 = vrot.lane.b32.xlu0 %v288, 32
  %v291 = vpop.permute.xlu0 %290
  %v293 = vmul.f32 %v275, %v291
  %v294 = vpack.c.bf16 %v293, %v293
  %296 = vrot.lane.b32.xlu0 %v294, 80
  %v297 = vpop.permute.xlu0 %296
  %v299 = vsel %vm149, %v297, 0
  %301 = vmatprep.subr.bf16.mxu0 0
  %302 = vmatpush1.bf16.msra.mxu0 %v147
  %303 = vmatprep.subr.bf16.mxu0 0
  %304 = vmatpush1.bf16.msra.mxu0 0
  %305 = vmatprep.subr.bf16.mxu0 0
  %306 = vmatpush1.bf16.msra.mxu0 0
  %307 = vmatprep.subr.bf16.mxu0 0
  %308 = vmatpush1.bf16.msra.mxu0 0
  %309 = vmatprep.subr.bf16.mxu0 0
  %310 = vmatpush1.bf16.msra.mxu0 0
  %311 = vmatprep.subr.bf16.mxu0 0
  %312 = vmatpush1.bf16.msra.mxu0 0
  %313 = vmatprep.subr.bf16.mxu0 0
  %314 = vmatpush1.bf16.msra.mxu0 0
  %315 = vmatprep.subr.bf16.mxu0 0
  %316 = vmatpush1.bf16.msra.mxu0 0
  %317 = vmatprep.subr.bf16.mxu0 0
  %318 = vmatpush1.bf16.msra.mxu0 0
  %319 = vmatprep.subr.bf16.mxu0 0
  %320 = vmatpush1.bf16.msra.mxu0 0
  %321 = vmatprep.subr.bf16.mxu0 0
  %322 = vmatpush1.bf16.msra.mxu0 0
  %323 = vmatprep.subr.bf16.mxu0 0
  %324 = vmatpush1.bf16.msra.mxu0 0
  %325 = vmatprep.subr.bf16.mxu0 0
  %326 = vmatpush1.bf16.msra.mxu0 0
  %327 = vmatprep.subr.bf16.mxu0 0
  %328 = vmatpush1.bf16.msra.mxu0 0
  %329 = vmatprep.subr.bf16.mxu0 0
  %330 = vmatpush1.bf16.msra.mxu0 0
  %331 = vmatprep.subr.bf16.mxu0 0
  %332 = vmatpush1.bf16.msra.mxu0 0
  %333 = vmatprep.mubr.bf16.mxu0 0
  %334 = vmatmul.mubr.bf16.gmra.mrb[0].mxu0 %v299
  %v335 = vpop.f32.mrb[0].mxu0
  %v336 = vadd.f32 0.0, %v335
  %v337 = vpop.f32.mrb[0].mxu0
  %v338 = vpop.f32.mrb[0].mxu0
  %v339 = vpop.f32.mrb[0].mxu0
  %340 = vdwg.mxu0
  %v341 = vadd.f32 %v108, %v336
  %v342 = vxor.u32 %v341, 2147483648
  %v343 = vmul.f32 %v342, 1.442695
  %v344 = vpow.pop %v343
  %v345 = vadd.f32 %v344, 1.0
  %v346 = vrcp.pop %v345
  %v347 = vmul.f32 1.0, %v346
  %v348 = vtanh.pop %v341
  %v349 = vmul.f32 %v347, %v287
  %351 = vrot.lane.b32.xlu0 %v348, 96
  %v352 = vpop.permute.xlu0 %351
  %v354 = vmul.f32 %v347, %v352
  %356 = vrot.lane.b32.xlu0 %v354, 16
  %v357 = vpop.permute.xlu0 %356
  %v359 = vadd.f32 %v349, %v357
  %v360 = vtanh.pop %v359
  %362 = vrot.lane.b32.xlu0 %v360, 32
  %v363 = vpop.permute.xlu0 %362
  %v365 = vmul.f32 %v347, %v363
  %v366 = vpack.c.bf16 %v365, %v365
  %368 = vrot.lane.b32.xlu0 %v366, 80
  %v369 = vpop.permute.xlu0 %368
  %v371 = vsel %vm149, %v369, 0
  %373 = vmatprep.subr.bf16.mxu0 0
  %374 = vmatpush1.bf16.msra.mxu0 %v147
  %375 = vmatprep.subr.bf16.mxu0 0
  %376 = vmatpush1.bf16.msra.mxu0 0
  %377 = vmatprep.subr.bf16.mxu0 0
  %378 = vmatpush1.bf16.msra.mxu0 0
  %379 = vmatprep.subr.bf16.mxu0 0
  %380 = vmatpush1.bf16.msra.mxu0 0
  %381 = vmatprep.subr.bf16.mxu0 0
  %382 = vmatpush1.bf16.msra.mxu0 0
  %383 = vmatprep.subr.bf16.mxu0 0
  %384 = vmatpush1.bf16.msra.mxu0 0
  %385 = vmatprep.subr.bf16.mxu0 0
  %386 = vmatpush1.bf16.msra.mxu0 0
  %387 = vmatprep.subr.bf16.mxu0 0
  %388 = vmatpush1.bf16.msra.mxu0 0
  %389 = vmatprep.subr.bf16.mxu0 0
  %390 = vmatpush1.bf16.msra.mxu0 0
  %391 = vmatprep.subr.bf16.mxu0 0
  %392 = vmatpush1.bf16.msra.mxu0 0
  %393 = vmatprep.subr.bf16.mxu0 0
  %394 = vmatpush1.bf16.msra.mxu0 0
  %395 = vmatprep.subr.bf16.mxu0 0
  %396 = vmatpush1.bf16.msra.mxu0 0
  %397 = vmatprep.subr.bf16.mxu0 0
  %398 = vmatpush1.bf16.msra.mxu0 0
  %399 = vmatprep.subr.bf16.mxu0 0
  %400 = vmatpush1.bf16.msra.mxu0 0
  %401 = vmatprep.subr.bf16.mxu0 0
  %402 = vmatpush1.bf16.msra.mxu0 0
  %403 = vmatprep.subr.bf16.mxu0 0
  %404 = vmatpush1.bf16.msra.mxu0 0
  %405 = vmatprep.mubr.bf16.mxu0 0
  %406 = vmatmul.mubr.bf16.gmra.mrb[0].mxu0 %v371
  %v407 = vpop.f32.mrb[0].mxu0
  %v408 = vadd.f32 0.0, %v407
  %v409 = vpop.f32.mrb[0].mxu0
  %v410 = vpop.f32.mrb[0].mxu0
  %v411 = vpop.f32.mrb[0].mxu0
  %412 = vdwg.mxu0
  %v413 = vadd.f32 %v113, %v408
  %v414 = vxor.u32 %v413, 2147483648
  %v415 = vmul.f32 %v414, 1.442695
  %v416 = vpow.pop %v415
  %v417 = vadd.f32 %v416, 1.0
  %v418 = vrcp.pop %v417
  %v419 = vmul.f32 1.0, %v418
  %v420 = vtanh.pop %v413
  %v421 = vmul.f32 %v419, %v359
  %423 = vrot.lane.b32.xlu0 %v420, 96
  %v424 = vpop.permute.xlu0 %423
  %v426 = vmul.f32 %v419, %v424
  %428 = vrot.lane.b32.xlu0 %v426, 16
  %v429 = vpop.permute.xlu0 %428
  %v431 = vadd.f32 %v421, %v429
  %v432 = vtanh.pop %v431
  %434 = vrot.lane.b32.xlu0 %v432, 32
  %v435 = vpop.permute.xlu0 %434
  %v437 = vmul.f32 %v419, %v435
  %v438 = vpack.c.bf16 %v437, %v437
  %440 = vrot.lane.b32.xlu0 %v438, 80
  %v441 = vpop.permute.xlu0 %440
  %v443 = vsel %vm149, %v441, 0
  %445 = vmatprep.subr.bf16.mxu0 0
  %446 = vmatpush1.bf16.msra.mxu0 %v147
  %447 = vmatprep.subr.bf16.mxu0 0
  %448 = vmatpush1.bf16.msra.mxu0 0
  %449 = vmatprep.subr.bf16.mxu0 0
  %450 = vmatpush1.bf16.msra.mxu0 0
  %451 = vmatprep.subr.bf16.mxu0 0
  %452 = vmatpush1.bf16.msra.mxu0 0
  %453 = vmatprep.subr.bf16.mxu0 0
  %454 = vmatpush1.bf16.msra.mxu0 0
  %455 = vmatprep.subr.bf16.mxu0 0
  %456 = vmatpush1.bf16.msra.mxu0 0
  %457 = vmatprep.subr.bf16.mxu0 0
  %458 = vmatpush1.bf16.msra.mxu0 0
  %459 = vmatprep.subr.bf16.mxu0 0
  %460 = vmatpush1.bf16.msra.mxu0 0
  %461 = vmatprep.subr.bf16.mxu0 0
  %462 = vmatpush1.bf16.msra.mxu0 0
  %463 = vmatprep.subr.bf16.mxu0 0
  %464 = vmatpush1.bf16.msra.mxu0 0
  %465 = vmatprep.subr.bf16.mxu0 0
  %466 = vmatpush1.bf16.msra.mxu0 0
  %467 = vmatprep.subr.bf16.mxu0 0
  %468 = vmatpush1.bf16.msra.mxu0 0
  %469 = vmatprep.subr.bf16.mxu0 0
  %470 = vmatpush1.bf16.msra.mxu0 0
  %471 = vmatprep.subr.bf16.mxu0 0
  %472 = vmatpush1.bf16.msra.mxu0 0
  %473 = vmatprep.subr.bf16.mxu0 0
  %474 = vmatpush1.bf16.msra.mxu0 0
  %475 = vmatprep.subr.bf16.mxu0 0
  %476 = vmatpush1.bf16.msra.mxu0 0
  %477 = vmatprep.mubr.bf16.mxu0 0
  %478 = vmatmul.mubr.bf16.gmra.mrb[0].mxu0 %v443
  %v479 = vpop.f32.mrb[0].mxu0
  %v480 = vadd.f32 0.0, %v479
  %v481 = vpop.f32.mrb[0].mxu0
  %v482 = vpop.f32.mrb[0].mxu0
  %v483 = vpop.f32.mrb[0].mxu0
  %484 = vdwg.mxu0
  %v485 = vadd.f32 %v116, %v480
  %v486 = vxor.u32 %v485, 2147483648
  %v487 = vmul.f32 %v486, 1.442695
  %v488 = vpow.pop %v487
  %v489 = vadd.f32 %v488, 1.0
  %v490 = vrcp.pop %v489
  %v491 = vmul.f32 1.0, %v490
  %v492 = vtanh.pop %v485
  %v493 = vmul.f32 %v491, %v431
  %495 = vrot.lane.b32.xlu0 %v492, 96
  %v496 = vpop.permute.xlu0 %495
  %v498 = vmul.f32 %v491, %v496
  %500 = vrot.lane.b32.xlu0 %v498, 16
  %v501 = vpop.permute.xlu0 %500
  %v503 = vadd.f32 %v493, %v501
  %v504 = vtanh.pop %v503
  %506 = vrot.lane.b32.xlu0 %v504, 32
  %v507 = vpop.permute.xlu0 %506
  %v509 = vmul.f32 %v491, %v507
  %v510 = vpack.c.bf16 %v509, %v509
  %v511 = vld [vmem:[%s3 + $0x10] sm:$0xf]
  %v512 = vld [vmem:[%s3 + $0x14] sm:$0xf]
  %v513 = vld [vmem:[%s4 + $0x1] sm:$0x1]
  %v514 = vlaneseq
  %v515 = vshrl.u32 %v514, 7
  %v516 = vsub.s32 0, %v515
  %v517 = vrot.slane %v513, %v516
  %519 = vrot.lane.b32.xlu0 %v510, 80
  %v520 = vpop.permute.xlu0 %519
  %v523 = vunpack.c.l.b16 %v511
  %v524 = vunpack.c.l.b16 %v512
  %v525 = vpack.c.b16 %v524, %v523
  %v528 = vsel %vm149, %v520, 0
  %530 = vmatprep.subr.bf16.mxu0 0
  %531 = vmatpush1.bf16.msra.mxu0 %v525
  %532 = vmatprep.subr.bf16.mxu0 0
  %533 = vmatpush1.bf16.msra.mxu0 0
  %534 = vmatprep.subr.bf16.mxu0 0
  %535 = vmatpush1.bf16.msra.mxu0 0
  %536 = vmatprep.subr.bf16.mxu0 0
  %537 = vmatpush1.bf16.msra.mxu0 0
  %538 = vmatprep.subr.bf16.mxu0 0
  %539 = vmatpush1.bf16.msra.mxu0 0
  %540 = vmatprep.subr.bf16.mxu0 0
  %541 = vmatpush1.bf16.msra.mxu0 0
  %542 = vmatprep.subr.bf16.mxu0 0
  %543 = vmatpush1.bf16.msra.mxu0 0
  %544 = vmatprep.subr.bf16.mxu0 0
  %545 = vmatpush1.bf16.msra.mxu0 0
  %546 = vmatprep.subr.bf16.mxu0 0
  %547 = vmatpush1.bf16.msra.mxu0 0
  %548 = vmatprep.subr.bf16.mxu0 0
  %549 = vmatpush1.bf16.msra.mxu0 0
  %550 = vmatprep.subr.bf16.mxu0 0
  %551 = vmatpush1.bf16.msra.mxu0 0
  %552 = vmatprep.subr.bf16.mxu0 0
  %553 = vmatpush1.bf16.msra.mxu0 0
  %554 = vmatprep.subr.bf16.mxu0 0
  %555 = vmatpush1.bf16.msra.mxu0 0
  %556 = vmatprep.subr.bf16.mxu0 0
  %557 = vmatpush1.bf16.msra.mxu0 0
  %558 = vmatprep.subr.bf16.mxu0 0
  %559 = vmatpush1.bf16.msra.mxu0 0
  %560 = vmatprep.subr.bf16.mxu0 0
  %561 = vmatpush1.bf16.msra.mxu0 0
  %562 = vmatprep.mubr.bf16.mxu0 0
  %563 = vmatmul.mubr.bf16.gmra.mrb[0].mxu0 %v528
  %v564 = vpop.f32.mrb[0].mxu0
  %v565 = vadd.f32 %v517, %v564
  %v566 = vpop.f32.mrb[0].mxu0
  %v567 = vpop.f32.mrb[0].mxu0
  %v568 = vpop.f32.mrb[0].mxu0
  %569 = vdwg.mxu0
  %v570 = vxor.u32 %v565, 2147483648
  %v571 = vmul.f32 %v570, 1.442695
  %v572 = vpow.pop %v571
  %v573 = vadd.f32 %v572, 1.0
  %v574 = vrcp.pop %v573
  %v575 = vmul.f32 1.0, %v574
  %v576 = vld [vmem:[%s3 + $0x18] sm:$0xf]
  %v577 = vld [vmem:[%s3 + $0x1c] sm:$0xf]
  %v578 = vld [vmem:[%s4 + $0x2] sm:$0x1]
  %v579 = vlaneseq
  %v580 = vshrl.u32 %v579, 7
  %v581 = vsub.s32 0, %v580
  %v582 = vrot.slane %v578, %v581
  %v585 = vunpack.c.l.b16 %v576
  %v586 = vunpack.c.l.b16 %v577
  %v587 = vpack.c.b16 %v586, %v585
  %589 = vmatprep.subr.bf16.mxu0 0
  %590 = vmatpush1.bf16.msra.mxu0 %v587
  %591 = vmatprep.subr.bf16.mxu0 0
  %592 = vmatpush1.bf16.msra.mxu0 0
  %593 = vmatprep.subr.bf16.mxu0 0
  %594 = vmatpush1.bf16.msra.mxu0 0
  %595 = vmatprep.subr.bf16.mxu0 0
  %596 = vmatpush1.bf16.msra.mxu0 0
  %597 = vmatprep.subr.bf16.mxu0 0
  %598 = vmatpush1.bf16.msra.mxu0 0
  %599 = vmatprep.subr.bf16.mxu0 0
  %600 = vmatpush1.bf16.msra.mxu0 0
  %601 = vmatprep.subr.bf16.mxu0 0
  %602 = vmatpush1.bf16.msra.mxu0 0
  %603 = vmatprep.subr.bf16.mxu0 0
  %604 = vmatpush1.bf16.msra.mxu0 0
  %605 = vmatprep.subr.bf16.mxu0 0
  %606 = vmatpush1.bf16.msra.mxu0 0
  %607 = vmatprep.subr.bf16.mxu0 0
  %608 = vmatpush1.bf16.msra.mxu0 0
  %609 = vmatprep.subr.bf16.mxu0 0
  %610 = vmatpush1.bf16.msra.mxu0 0
  %611 = vmatprep.subr.bf16.mxu0 0
  %612 = vmatpush1.bf16.msra.mxu0 0
  %613 = vmatprep.subr.bf16.mxu0 0
  %614 = vmatpush1.bf16.msra.mxu0 0
  %615 = vmatprep.subr.bf16.mxu0 0
  %616 = vmatpush1.bf16.msra.mxu0 0
  %617 = vmatprep.subr.bf16.mxu0 0
  %618 = vmatpush1.bf16.msra.mxu0 0
  %619 = vmatprep.subr.bf16.mxu0 0
  %620 = vmatpush1.bf16.msra.mxu0 0
  %621 = vmatprep.mubr.bf16.mxu0 0
  %622 = vmatmul.mubr.bf16.gmra.mrb[0].mxu0 %v528
  %v623 = vpop.f32.mrb[0].mxu0
  %v624 = vadd.f32 %v582, %v623
  %v625 = vpop.f32.mrb[0].mxu0
  %v626 = vpop.f32.mrb[0].mxu0
  %v627 = vpop.f32.mrb[0].mxu0
  %628 = vdwg.mxu0
  %v629 = vxor.u32 %v624, 2147483648
  %v630 = vmul.f32 %v629, 1.442695
  %v631 = vpow.pop %v630
  %v632 = vadd.f32 %v631, 1.0
  %v633 = vrcp.pop %v632
  %v634 = vmul.f32 1.0, %v633
  %v635 = vld [vmem:[%s1] sm:$0xff]
  %v636 = vmul.f32 %v635, %v575
  %v637 = vpack.c.bf16 %v636, %v636
  %v638 = vld [vmem:[%s3 + $0x20] sm:$0x7]
  %v639 = vld [vmem:[%s4 + $0x3] sm:$0x1]
  %v640 = vlaneseq
  %v641 = vshrl.u32 %v640, 7
  %v642 = vsub.s32 0, %v641
  %v643 = vrot.slane %v639, %v642
  %vm644 = vcmask 48128
  %v646 = vsel %vm644, %v637, 0
  %vm648 = vcmask 1042432
  %v650 = vsel %vm648, %v638, 0
  %652 = vmatprep.subr.bf16.mxu0 0
  %653 = vmatpush1.bf16.msra.mxu0 %v650
  %654 = vmatprep.subr.bf16.mxu0 0
  %655 = vmatpush1.bf16.msra.mxu0 0
  %656 = vmatprep.subr.bf16.mxu0 0
  %657 = vmatpush1.bf16.msra.mxu0 0
  %658 = vmatprep.subr.bf16.mxu0 0
  %659 = vmatpush1.bf16.msra.mxu0 0
  %660 = vmatprep.subr.bf16.mxu0 0
  %661 = vmatpush1.bf16.msra.mxu0 0
  %662 = vmatprep.subr.bf16.mxu0 0
  %663 = vmatpush1.bf16.msra.mxu0 0
  %664 = vmatprep.subr.bf16.mxu0 0
  %665 = vmatpush1.bf16.msra.mxu0 0
  %666 = vmatprep.subr.bf16.mxu0 0
  %667 = vmatpush1.bf16.msra.mxu0 0
  %668 = vmatprep.subr.bf16.mxu0 0
  %669 = vmatpush1.bf16.msra.mxu0 0
  %670 = vmatprep.subr.bf16.mxu0 0
  %671 = vmatpush1.bf16.msra.mxu0 0
  %672 = vmatprep.subr.bf16.mxu0 0
  %673 = vmatpush1.bf16.msra.mxu0 0
  %674 = vmatprep.subr.bf16.mxu0 0
  %675 = vmatpush1.bf16.msra.mxu0 0
  %676 = vmatprep.subr.bf16.mxu0 0
  %677 = vmatpush1.bf16.msra.mxu0 0
  %678 = vmatprep.subr.bf16.mxu0 0
  %679 = vmatpush1.bf16.msra.mxu0 0
  %680 = vmatprep.subr.bf16.mxu0 0
  %681 = vmatpush1.bf16.msra.mxu0 0
  %682 = vmatprep.subr.bf16.mxu0 0
  %683 = vmatpush1.bf16.msra.mxu0 0
  %684 = vmatprep.mubr.bf16.mxu0 0
  %685 = vmatmul.mubr.bf16.gmra.mrb[0].mxu0 %v646
  %v686 = vpop.f32.mrb[0].mxu0
  %v687 = vadd.f32 %v643, %v686
  %v688 = vpop.f32.mrb[0].mxu0
  %v689 = vpop.f32.mrb[0].mxu0
  %v690 = vpop.f32.mrb[0].mxu0
  %691 = vdwg.mxu0
  %v692 = vld [vmem:[%s2] sm:$0xff]
  %v693 = vld [vmem:[%s2 + $0x8] sm:$0xff]
  %v694 = vmul.f32 %v692, %v634
  %v695 = vmul.f32 %v693, %v634
  %v696 = vpack.c.bf16 %v695, %v694
  %v697 = vld [vmem:[%s3 + $0x28] sm:$0x3]
  %vm698 = vcmask 31744
  %v700 = vsel %vm698, %v696, 0
  %vm702 = vcmask 1041408
  %v704 = vsel %vm702, %v697, 0
  %706 = vmatprep.subr.bf16.mxu0 0
  %707 = vmatpush1.bf16.msra.mxu0 %v704
  %708 = vmatprep.subr.bf16.mxu0 0
  %709 = vmatpush1.bf16.msra.mxu0 0
  %710 = vmatprep.subr.bf16.mxu0 0
  %711 = vmatpush1.bf16.msra.mxu0 0
  %712 = vmatprep.subr.bf16.mxu0 0
  %713 = vmatpush1.bf16.msra.mxu0 0
  %714 = vmatprep.subr.bf16.mxu0 0
  %715 = vmatpush1.bf16.msra.mxu0 0
  %716 = vmatprep.subr.bf16.mxu0 0
  %717 = vmatpush1.bf16.msra.mxu0 0
  %718 = vmatprep.subr.bf16.mxu0 0
  %719 = vmatpush1.bf16.msra.mxu0 0
  %720 = vmatprep.subr.bf16.mxu0 0
  %721 = vmatpush1.bf16.msra.mxu0 0
  %722 = vmatprep.subr.bf16.mxu0 0
  %723 = vmatpush1.bf16.msra.mxu0 0
  %724 = vmatprep.subr.bf16.mxu0 0
  %725 = vmatpush1.bf16.msra.mxu0 0
  %726 = vmatprep.subr.bf16.mxu0 0
  %727 = vmatpush1.bf16.msra.mxu0 0
  %728 = vmatprep.subr.bf16.mxu0 0
  %729 = vmatpush1.bf16.msra.mxu0 0
  %730 = vmatprep.subr.bf16.mxu0 0
  %731 = vmatpush1.bf16.msra.mxu0 0
  %732 = vmatprep.subr.bf16.mxu0 0
  %733 = vmatpush1.bf16.msra.mxu0 0
  %734 = vmatprep.subr.bf16.mxu0 0
  %735 = vmatpush1.bf16.msra.mxu0 0
  %736 = vmatprep.subr.bf16.mxu0 0
  %737 = vmatpush1.bf16.msra.mxu0 0
  %738 = vmatprep.mubr.bf16.mxu0 0
  %739 = vmatmul.mubr.bf16.gmra.mrb[0].mxu0 %v700
  %v740 = vpop.f32.mrb[0].mxu0
  %v741 = vadd.f32 0.0, %v740
  %v742 = vpop.f32.mrb[0].mxu0
  %v743 = vpop.f32.mrb[0].mxu0
  %v744 = vadd.f32 0.0, %v743
  %v745 = vpop.f32.mrb[0].mxu0
  %746 = vdwg.mxu0
  %v747 = vadd.f32 %v741, %v687
  %v748 = vadd.f32 %v744, %v687
  %v749 = vmax.f32 %v747, 0.0
  %v750 = vmax.f32 %v748, 0.0
  %v751 = vpack.c.bf16 %v750, %v749
  %v752 = vld [vmem:[%s3 + $0x30] sm:$0xf]
  %v753 = vld [vmem:[%s3 + $0x34] sm:$0xf]
  %v754 = vld [vmem:[%s3 + $0x38] sm:$0xf]
  %v755 = vld [vmem:[%s3 + $0x3c] sm:$0xf]
  %v756 = vld [vmem:[%s3 + $0x40] sm:$0xf]
  %v757 = vld [vmem:[%s3 + $0x44] sm:$0xf]
  %v758 = vld [vmem:[%s3 + $0x48] sm:$0xf]
  %v759 = vld [vmem:[%s3 + $0x4c] sm:$0xf]
  %v760 = vld [vmem:[%s3 + $0x50] sm:$0xf]
  %v761 = vld [vmem:[%s3 + $0x54] sm:$0xf]
  %v762 = vld [vmem:[%s3 + $0x58] sm:$0xf]
  %v763 = vld [vmem:[%s3 + $0x5c] sm:$0xf]
  %v764 = vld [vmem:[%s3 + $0x60] sm:$0x3]
  %v765 = vld [vmem:[%s4 + $0x4] sm:$0x1]
  %v766 = vlaneseq
  %v767 = vshrl.u32 %v766, 7
  %v768 = vsub.s32 0, %v767
  %v769 = vrot.slane %v765, %v768
  %v783 = vunpack.c.l.b16 %v752
  %v784 = vunpack.c.l.b16 %v753
  %v785 = vunpack.c.l.b16 %v754
  %v786 = vunpack.c.l.b16 %v755
  %v787 = vunpack.c.l.b16 %v756
  %v788 = vunpack.c.l.b16 %v757
  %v789 = vunpack.c.l.b16 %v758
  %v790 = vunpack.c.l.b16 %v759
  %v791 = vunpack.c.l.b16 %v760
  %v792 = vunpack.c.l.b16 %v761
  %v793 = vunpack.c.l.b16 %v762
  %v794 = vunpack.c.l.b16 %v763
  %v795 = vunpack.c.l.b16 %v764
  %v796 = vpack.c.b16 %v784, %v783
  %v797 = vpack.c.b16 %v786, %v785
  %v798 = vpack.c.b16 %v788, %v787
  %v799 = vpack.c.b16 %v790, %v789
  %v800 = vpack.c.b16 %v792, %v791
  %v801 = vpack.c.b16 %v794, %v793
  %v802 = vpack.c.b16 %v795, %v795
  %vm809 = vcmask 818176
  %v811 = vsel %vm809, %v751, 0
  %v814 = vsel %vm702, %v802, 0
  %816 = vmatprep.subr.bf16.mxu0 0
  %817 = vmatpush1.bf16.msra.mxu0 %v796
  %818 = vmatprep.subr.bf16.mxu0 0
  %819 = vmatpush1.bf16.msra.mxu0 %v797
  %820 = vmatprep.subr.bf16.mxu0 0
  %821 = vmatpush1.bf16.msra.mxu0 %v798
  %822 = vmatprep.subr.bf16.mxu0 0
  %823 = vmatpush1.bf16.msra.mxu0 %v799
  %824 = vmatprep.subr.bf16.mxu0 0
  %825 = vmatpush1.bf16.msra.mxu0 %v800
  %826 = vmatprep.subr.bf16.mxu0 0
  %827 = vmatpush1.bf16.msra.mxu0 %v801
  %828 = vmatprep.subr.bf16.mxu0 0
  %829 = vmatpush1.bf16.msra.mxu0 %v814
  %830 = vmatprep.subr.bf16.mxu0 0
  %831 = vmatpush1.bf16.msra.mxu0 0
  %832 = vmatprep.subr.bf16.mxu0 0
  %833 = vmatpush1.bf16.msra.mxu0 0
  %834 = vmatprep.subr.bf16.mxu0 0
  %835 = vmatpush1.bf16.msra.mxu0 0
  %836 = vmatprep.subr.bf16.mxu0 0
  %837 = vmatpush1.bf16.msra.mxu0 0
  %838 = vmatprep.subr.bf16.mxu0 0
  %839 = vmatpush1.bf16.msra.mxu0 0
  %840 = vmatprep.subr.bf16.mxu0 0
  %841 = vmatpush1.bf16.msra.mxu0 0
  %842 = vmatprep.subr.bf16.mxu0 0
  %843 = vmatpush1.bf16.msra.mxu0 0
  %844 = vmatprep.subr.bf16.mxu0 0
  %845 = vmatpush1.bf16.msra.mxu0 0
  %846 = vmatprep.subr.bf16.mxu0 0
  %847 = vmatpush1.bf16.msra.mxu0 0
  %848 = vmatprep.mubr.bf16.mxu0 0
  %849 = vmatmul.mubr.bf16.gmra.mrb[0].mxu0 %v811
  %v850 = vpop.f32.mrb[0].mxu0
  %v851 = vadd.f32 %v769, %v850
  %v852 = vpop.f32.mrb[0].mxu0
  %v853 = vpop.f32.mrb[0].mxu0
  %v854 = vadd.f32 %v769, %v853
  %v855 = vpop.f32.mrb[0].mxu0
  %856 = vdwg.mxu0
  %v857 = vxor.u32 %v851, 2147483648
  %v858 = vxor.u32 %v854, 2147483648
  %v859 = vmul.f32 %v857, 1.442695
  %v860 = vpow.pop %v859
  %v861 = vmul.f32 %v858, 1.442695
  %v862 = vpow.pop %v861
  %v863 = vadd.f32 %v860, 1.0
  %v864 = vadd.f32 %v862, 1.0
  %v865 = vrcp.pop %v863
  %v866 = vmul.f32 1.0, %v865
  %v867 = vrcp.pop %v864
  %v868 = vmul.f32 1.0, %v867
  %vm869 = vcmask 7168
  %870 = vst.msk [vmem:[%s5] sm:$0xff] %vm869, %v866
  %871 = vst.msk [vmem:[%s5 + $0x8] sm:$0xff] %vm869, %v868
  // Predicated region
  $region22: #{reward_function_forward.1} parent=0 // pred_check
    _
  $region23: #{reward_function_forward.1} parent=0 // pred_check_branch
    %873 = sbr.rel (0) target = $region25
  $region24: #{reward_function_forward.1} parent=0 // pred_region
    _
  $region25: #{reward_function_forward.1} parent=0 // pred_fallthru
    _
  // Predicated region
  $region26: #{reward_function_forward.1} parent=0 // pred_check
    _
  $region27: #{reward_function_forward.1} parent=0 // pred_check_branch
    %875 = sbr.rel (0) target = $region29
  $region28: #{reward_function_forward.1} parent=0 // pred_region
    _
  $region29: #{reward_function_forward.1} parent=0 // pred_fallthru
    _

</llo_original>
